<compile_context>
chip_gen: v5e
topology: v5e:2x2
jax: 0.10.0
libtpu: 0.0.40
codegen_flags: <defaults>
</compile_context>

<pallas_src>
import functools

import jax
import jax.numpy as jnp
from jax.experimental import pallas as pl
from jax.experimental.pallas import tpu as pltpu

LANE = 128        # hidden feature dims are zero-padded to one lane-width
NUM_LAYERS = 5


def _round_up(x, m):
    return ((x + m - 1) // m) * m


def _actor_kernel(x_ref, w0_ref, w_ref, b_ref, out_ref):
    # x_ref:   (TM, in_dims)        real-width activations (compute dtype)
    # w0_ref:  (in_dims, LANE)      first-layer weight, cols zero-padded to 128
    # w_ref:   (LANE, 4*LANE)       layers 1..4, pre-transposed, zero-padded
    # b_ref:   (1, 5*LANE)          all biases, zero-padded, f32
    # out_ref: (TM, out_width)      narrow tanh output (out_width <= LANE), f32
    cdtype = w_ref.dtype
    out_width = out_ref.shape[1]

    # Layer 0: contract over the real input width (no 128-lane activation pad).
    acc = jnp.dot(x_ref[...].astype(cdtype), w0_ref[...],
                  preferred_element_type=jnp.float32) + b_ref[:, 0:LANE]
    h = jnp.maximum(acc, 0.0).astype(cdtype)

    # Layers 1..4, statically unrolled.  Padded lanes stay exactly zero:
    # zero weight cols + zero bias -> relu(0) = 0 -> zero rows of next weight.
    for k in range(1, NUM_LAYERS):
        w = w_ref[:, (k - 1) * LANE:k * LANE]          # static lane-aligned slice
        b = b_ref[:, k * LANE:(k + 1) * LANE]
        acc = jnp.dot(h, w, preferred_element_type=jnp.float32) + b
        if k < NUM_LAYERS - 1:
            h = jnp.maximum(acc, 0.0).astype(cdtype)   # ReLU in f32, recast

    # Final tanh only on the narrow output slice (padded cols are exactly 0).
    out_ref[...] = jnp.tanh(acc[:, :out_width]).astype(out_ref.dtype)


def pack_actor_params(params, compute_dtype=jnp.bfloat16):
    """One-time parameter prep (do NOT call per forward).

    params: list of (W, b) with W shape (out, in), b shape (out,) — PyTorch layout.
    Returns:
      w0:     (in_dims, LANE)   first-layer weight (transposed, cols padded)
      w_slab: (LANE, 4*LANE)    layers 1..4 weights (transposed, padded)
      b_slab: (1, 5*LANE)       all biases (padded), f32
    """
    assert len(params) == NUM_LAYERS
    w0, b0 = params[0]
    w0 = jnp.asarray(w0, jnp.float32).T                            # (in, out0)
    assert w0.shape[1] <= LANE
    w0 = jnp.pad(w0, ((0, 0), (0, LANE - w0.shape[1]))).astype(compute_dtype)

    b_cols = [jnp.pad(jnp.asarray(b0, jnp.float32)[None, :],
                      ((0, 0), (0, LANE - b0.shape[0])))]
    w_cols = []
    for w, b in params[1:]:
        w = jnp.asarray(w, jnp.float32).T                          # (in, out)
        b = jnp.asarray(b, jnp.float32)[None, :]
        assert w.shape[0] <= LANE and w.shape[1] <= LANE
        w_cols.append(jnp.pad(w, ((0, LANE - w.shape[0]), (0, LANE - w.shape[1]))))
        b_cols.append(jnp.pad(b, ((0, 0), (0, LANE - b.shape[1]))))
    w_slab = jnp.concatenate(w_cols, axis=1).astype(compute_dtype)
    b_slab = jnp.concatenate(b_cols, axis=1).astype(jnp.float32)
    return w0, w_slab, b_slab


@functools.partial(jax.jit, static_argnames=("action_space", "block_m"))
def actor_forward(x, w0, w_slab, b_slab, *, action_space, block_m=1024):
    """Forward pass. x: (batch, input_dims). Returns (batch, action_space) f32."""
    batch, in_dims = x.shape
    compute_dtype = w_slab.dtype
    out_width = min(LANE, _round_up(action_space, 8))   # narrow, contiguous output

    # Batch tile: multiple of 8 sublanes; aim for >= 2 grid steps so v7x's two
    # TensorCores both get work; cap at block_m (VMEM-safe on v5e/v6e/v7x).
    rows = _round_up(batch, 8)
    tm = max(8, min(block_m, _round_up((rows + 1) // 2, 8)))
    padded_batch = _round_up(batch, tm)

    # Only a narrow batch-row pad (real feature width); no-op when already aligned.
    x_c = x.astype(compute_dtype)
    if padded_batch != batch:
        x_c = jnp.pad(x_c, ((0, padded_batch - batch), (0, 0)))

    out = pl.pallas_call(
        _actor_kernel,
        out_shape=jax.ShapeDtypeStruct((padded_batch, out_width), jnp.float32),
        grid=(padded_batch // tm,),
        in_specs=[
            pl.BlockSpec((tm, in_dims), lambda i: (i, 0)),              # activations
            pl.BlockSpec((in_dims, LANE), lambda i: (0, 0)),            # layer-0 W
            pl.BlockSpec((LANE, (NUM_LAYERS - 1) * LANE), lambda i: (0, 0)),  # W slab
            pl.BlockSpec((1, NUM_LAYERS * LANE), lambda i: (0, 0)),     # bias slab
        ],
        out_specs=pl.BlockSpec((tm, out_width), lambda i: (i, 0)),
        compiler_params=pltpu.CompilerParams(
            dimension_semantics=("parallel",)),   # megacore sharding on v7x
    )(x_c, w0, w_slab, b_slab)

    return out[:batch, :action_space]


# ----------------------------------------------------------------------------
# Reference + demo
# ----------------------------------------------------------------------------
def init_linear(key, in_features, out_features):
    """PyTorch nn.Linear default init: uniform +/- 1/sqrt(in)."""
    kw, kb = jax.random.split(key)
    bound = 1.0 / jnp.sqrt(jnp.float32(in_features))
    w = jax.random.uniform(kw, (out_features, in_features), jnp.float32, -bound, bound)
    b = jax.random.uniform(kb, (out_features,), jnp.float32, -bound, bound)
    return w, b


def reference_forward(x, params):
    h = x.astype(jnp.float32)
    for i, (w, b) in enumerate(params):
        h = h @ w.T + b
        h = jnp.maximum(h, 0.0) if i < len(params) - 1 else jnp.tanh(h)
    return h


if __name__ == "__main__":
    # Shapes consistent with the module constructor:
    # input_dims=8, input_out=32, layer1=64, layer2=64, layer3=32, action_space=4
    input_dims, input_out = 8, 32
    layer1_dims, layer2_dims, layer3_dims = 64, 64, 32
    action_space = 4

    key = jax.random.PRNGKey(0)
    keys = jax.random.split(key, 7)

    params = [
        init_linear(keys[0], input_dims, input_out),
        init_linear(keys[1], input_out, layer1_dims),
        init_linear(keys[2], layer1_dims, layer2_dims),
        init_linear(keys[3], layer2_dims, layer3_dims),
        init_linear(keys[4], layer3_dims, action_space),
    ]

    # --- bf16 compute (default, MXU-native), small batch ---
    w0_bf, w_slab_bf, b_slab_bf = pack_actor_params(params)  # bf16 default
    x_small = jax.random.normal(keys[5], (2, input_dims), jnp.float32)
    out_bf = jax.block_until_ready(
        actor_forward(x_small, w0_bf, w_slab_bf, b_slab_bf, action_space=action_space))
    ref_small = reference_forward(x_small, params)
    assert out_bf.shape == (2, action_space), out_bf.shape
    assert jnp.allclose(out_bf, ref_small, atol=5e-2, rtol=5e-2), (out_bf, ref_small)

    # --- f32 compute path (exact math), multi-tile batch exercises the grid ---
    w0_f32, w_slab_f32, b_slab_f32 = pack_actor_params(params, compute_dtype=jnp.float32)
    x_big = jax.random.normal(keys[6], (300, input_dims), jnp.float32)
    out_f32 = jax.block_until_ready(
        actor_forward(x_big, w0_f32, w_slab_f32, b_slab_f32, action_space=action_space))
    ref_big = reference_forward(x_big, params)
    assert out_f32.shape == (300, action_space), out_f32.shape
    assert jnp.allclose(out_f32, ref_big, atol=1e-5, rtol=1e-5), (out_f32, ref_big)

    print("KERNEL_OK")
</pallas_src>

<mosaic_0001>
module attributes {stable_mosaic.version = 11 : i64} {
  func.func @_actor_kernel(%arg0: i32, %arg1: memref<8x8xbf16, #tpu.memory_space<vmem>>, %arg2: memref<8x128xbf16, #tpu.memory_space<vmem>>, %arg3: memref<128x512xbf16, #tpu.memory_space<vmem>>, %arg4: memref<1x640xf32, #tpu.memory_space<vmem>>, %arg5: memref<8x8xf32, #tpu.memory_space<vmem>>) attributes {dimension_semantics = [#tpu.dimension_semantics<parallel>], iteration_bounds = array<i64: 1>, scalar_prefetch = 0 : i64, scratch_operands = 0 : i64, tpu.core_type = #tpu.core_type<tc>, window_params = [{transform_indices = @transform_0, window_bounds = array<i64: 8, 8>}, {pipeline_mode = #tpu.pipeline_mode<synchronous>, transform_indices = @transform_1, window_bounds = array<i64: 8, 128>}, {pipeline_mode = #tpu.pipeline_mode<synchronous>, transform_indices = @transform_2, window_bounds = array<i64: 128, 512>}, {pipeline_mode = #tpu.pipeline_mode<synchronous>, transform_indices = @transform_3, window_bounds = array<i64: 1, 640>}, {transform_indices = @transform_4, window_bounds = array<i64: 8, 8>}]} {
    %c0 = arith.constant 0 : index
    %c0_0 = arith.constant 0 : index
    %0 = vector.load %arg1[%c0, %c0_0] : memref<8x8xbf16, #tpu.memory_space<vmem>>, vector<8x8xbf16>
    %c0_1 = arith.constant 0 : index
    %c0_2 = arith.constant 0 : index
    %1 = vector.load %arg2[%c0_1, %c0_2] : memref<8x128xbf16, #tpu.memory_space<vmem>>, vector<8x128xbf16>
    %cst = arith.constant dense<0.000000e+00> : vector<8x128xf32>
    %2 = tpu.matmul %0, %1, %cst {dimension_numbers = #tpu.dot_dimension_numbers<[1], [0], [0], [1], [0, 0, 1, 1], [], []>} : vector<8x8xbf16>, vector<8x128xbf16>, vector<8x128xf32> -> vector<8x128xf32>
    %c0_3 = arith.constant 0 : index
    %c0_4 = arith.constant 0 : index
    %3 = vector.load %arg4[%c0_3, %c0_4] : memref<1x640xf32, #tpu.memory_space<vmem>>, vector<1x128xf32>
    %4 = vector.broadcast %3 : vector<1x128xf32> to vector<8x128xf32>
    %5 = arith.addf %2, %4 : vector<8x128xf32>
    %cst_5 = arith.constant 0.000000e+00 : f32
    %6 = vector.broadcast %cst_5 : f32 to vector<8x128xf32>
    %7 = arith.maximumf %5, %6 : vector<8x128xf32>
    %8 = arith.truncf %7 : vector<8x128xf32> to vector<8x128xbf16>
    %c0_6 = arith.constant 0 : index
    %c0_7 = arith.constant 0 : index
    %9 = vector.load %arg3[%c0_6, %c0_7] : memref<128x512xbf16, #tpu.memory_space<vmem>>, vector<128x128xbf16>
    %c0_8 = arith.constant 0 : index
    %c128 = arith.constant 128 : index
    %10 = vector.load %arg4[%c0_8, %c128] : memref<1x640xf32, #tpu.memory_space<vmem>>, vector<1x128xf32>
    %cst_9 = arith.constant dense<0.000000e+00> : vector<8x128xf32>
    %11 = tpu.matmul %8, %9, %cst_9 {dimension_numbers = #tpu.dot_dimension_numbers<[1], [0], [0], [1], [0, 0, 1, 1], [], []>} : vector<8x128xbf16>, vector<128x128xbf16>, vector<8x128xf32> -> vector<8x128xf32>
    %12 = vector.broadcast %10 : vector<1x128xf32> to vector<8x128xf32>
    %13 = arith.addf %11, %12 : vector<8x128xf32>
    %cst_10 = arith.constant 0.000000e+00 : f32
    %14 = vector.broadcast %cst_10 : f32 to vector<8x128xf32>
    %15 = arith.maximumf %13, %14 : vector<8x128xf32>
    %16 = arith.truncf %15 : vector<8x128xf32> to vector<8x128xbf16>
    %c0_11 = arith.constant 0 : index
    %c128_12 = arith.constant 128 : index
    %17 = vector.load %arg3[%c0_11, %c128_12] : memref<128x512xbf16, #tpu.memory_space<vmem>>, vector<128x128xbf16>
    %c0_13 = arith.constant 0 : index
    %c256 = arith.constant 256 : index
    %18 = vector.load %arg4[%c0_13, %c256] : memref<1x640xf32, #tpu.memory_space<vmem>>, vector<1x128xf32>
    %cst_14 = arith.constant dense<0.000000e+00> : vector<8x128xf32>
    %19 = tpu.matmul %16, %17, %cst_14 {dimension_numbers = #tpu.dot_dimension_numbers<[1], [0], [0], [1], [0, 0, 1, 1], [], []>} : vector<8x128xbf16>, vector<128x128xbf16>, vector<8x128xf32> -> vector<8x128xf32>
    %20 = vector.broadcast %18 : vector<1x128xf32> to vector<8x128xf32>
    %21 = arith.addf %19, %20 : vector<8x128xf32>
    %cst_15 = arith.constant 0.000000e+00 : f32
    %22 = vector.broadcast %cst_15 : f32 to vector<8x128xf32>
    %23 = arith.maximumf %21, %22 : vector<8x128xf32>
    %24 = arith.truncf %23 : vector<8x128xf32> to vector<8x128xbf16>
    %c0_16 = arith.constant 0 : index
    %c256_17 = arith.constant 256 : index
    %25 = vector.load %arg3[%c0_16, %c256_17] : memref<128x512xbf16, #tpu.memory_space<vmem>>, vector<128x128xbf16>
    %c0_18 = arith.constant 0 : index
    %c384 = arith.constant 384 : index
    %26 = vector.load %arg4[%c0_18, %c384] : memref<1x640xf32, #tpu.memory_space<vmem>>, vector<1x128xf32>
    %cst_19 = arith.constant dense<0.000000e+00> : vector<8x128xf32>
    %27 = tpu.matmul %24, %25, %cst_19 {dimension_numbers = #tpu.dot_dimension_numbers<[1], [0], [0], [1], [0, 0, 1, 1], [], []>} : vector<8x128xbf16>, vector<128x128xbf16>, vector<8x128xf32> -> vector<8x128xf32>
    %28 = vector.broadcast %26 : vector<1x128xf32> to vector<8x128xf32>
    %29 = arith.addf %27, %28 : vector<8x128xf32>
    %cst_20 = arith.constant 0.000000e+00 : f32
    %30 = vector.broadcast %cst_20 : f32 to vector<8x128xf32>
    %31 = arith.maximumf %29, %30 : vector<8x128xf32>
    %32 = arith.truncf %31 : vector<8x128xf32> to vector<8x128xbf16>
    %c0_21 = arith.constant 0 : index
    %c384_22 = arith.constant 384 : index
    %33 = vector.load %arg3[%c0_21, %c384_22] : memref<128x512xbf16, #tpu.memory_space<vmem>>, vector<128x128xbf16>
    %c0_23 = arith.constant 0 : index
    %c512 = arith.constant 512 : index
    %34 = vector.load %arg4[%c0_23, %c512] : memref<1x640xf32, #tpu.memory_space<vmem>>, vector<1x128xf32>
    %cst_24 = arith.constant dense<0.000000e+00> : vector<8x128xf32>
    %35 = tpu.matmul %32, %33, %cst_24 {dimension_numbers = #tpu.dot_dimension_numbers<[1], [0], [0], [1], [0, 0, 1, 1], [], []>} : vector<8x128xbf16>, vector<128x128xbf16>, vector<8x128xf32> -> vector<8x128xf32>
    %36 = vector.broadcast %34 : vector<1x128xf32> to vector<8x128xf32>
    %37 = arith.addf %35, %36 : vector<8x128xf32>
    %38 = vector.extract_strided_slice %37 {offsets = [0, 0], sizes = [8, 8], strides = [1, 1]} : vector<8x128xf32> to vector<8x8xf32>
    %39 = math.tanh %38 : vector<8x8xf32>
    %c0_25 = arith.constant 0 : index
    %c0_26 = arith.constant 0 : index
    %40 = vector.load %arg5[%c0_25, %c0_26] : memref<8x8xf32, #tpu.memory_space<vmem>>, vector<8x8xf32>
    tpu.vector_store %arg5[%c0_25, %c0_26], %39 {strides = array<i32>} : memref<8x8xf32, #tpu.memory_space<vmem>>, vector<8x8xf32>,
    return
  }
  func.func @transform_0(%arg0: i32) -> (i32, i32) {
    %c0_i32 = arith.constant 0 : i32
    %c0_i32_0 = arith.constant 0 : i32
    return %arg0, %c0_i32 : i32, i32
  }
  func.func @transform_1(%arg0: i32) -> (i32, i32) {
    %c0_i32 = arith.constant 0 : i32
    %c0_i32_0 = arith.constant 0 : i32
    %c0_i32_1 = arith.constant 0 : i32
    return %c0_i32, %c0_i32_0 : i32, i32
  }
  func.func @transform_2(%arg0: i32) -> (i32, i32) {
    %c0_i32 = arith.constant 0 : i32
    %c0_i32_0 = arith.constant 0 : i32
    %c0_i32_1 = arith.constant 0 : i32
    return %c0_i32, %c0_i32_0 : i32, i32
  }
  func.func @transform_3(%arg0: i32) -> (i32, i32) {
    %c0_i32 = arith.constant 0 : i32
    %c0_i32_0 = arith.constant 0 : i32
    %c0_i32_1 = arith.constant 0 : i32
    return %c0_i32, %c0_i32_0 : i32, i32
  }
  func.func @transform_4(%arg0: i32) -> (i32, i32) {
    %c0_i32 = arith.constant 0 : i32
    %c0_i32_0 = arith.constant 0 : i32
    return %arg0, %c0_i32 : i32, i32
  }
}

</mosaic_0001>

<llo_original>
// kernel: actor_forward.1
$region0: #{actor_forward.1}
  #allocation0 [shape = 'u32[]', space=smem, size = 0x4, offset = 0x4, fixed_abs, tag = 'smem constant byte address 0x4 - core index']
  #allocation1 [shape = 'u32[72,128]{1,0:T(1,128)}', space=vmem, size = 0x9000, scoped, tag = 'internal scratch']
  %s0 = inlined_call_operand.vmem [shape: bf16[8,8], index: 0, kind: input, shape index: {}]
  %s1 = inlined_call_operand.vmem [shape: bf16[8,128], index: 1, kind: input, shape index: {}]
  %s2 = inlined_call_operand.hbm [shape: bf16[128,512], index: 2, kind: input, shape index: {}]
  %s3 = inlined_call_operand.vmem [shape: f32[1,640], index: 3, kind: input, shape index: {}]
  %s4 = inlined_call_operand.vmem [shape: f32[8,8], index: 4, kind: output, shape index: {}]
  %s5 = sld [smem:[#allocation0]]
  $region30: #{actor_forward.1} parent=0
    _
  %s7 = ssub.s32 1, %s5
  %s8 = scalar_select 0, %s7, %s5
  $region1: #{actor_forward.1} parent=0
    #allocation2 [shape = 'u8[131072]{0}', space=vmem, size = 0x20000, scoped, tag = 'input window, operand 2, single buffered']
    #allocation3 [shape = 's32[1]{0}', space=sflag, size = 0x4, scoped, tag = 'scoped memory for actor_forward.1']
    %9 = vsyncpa [#allocation3], 0
    // Predicated region
    $region2: #{actor_forward.1} parent=1 // pred_check
      _
    $region3: #{actor_forward.1} parent=1 // pred_check_branch
      %11 = sbr.rel (0) target = $region5
    $region4: #{actor_forward.1} parent=1 // pred_region
      _
    $region5: #{actor_forward.1} parent=1 // pred_fallthru
      _
    // Predicated region
    $region6: #{actor_forward.1} parent=1 // pred_check
      _
    $region7: #{actor_forward.1} parent=1 // pred_check_branch
      %13 = sbr.rel (0) target = $region9
    $region8: #{actor_forward.1} parent=1 // pred_region
      _
    $region9: #{actor_forward.1} parent=1 // pred_fallthru
      _
    // Predicated region
    $region10: #{actor_forward.1} parent=1 // pred_check
      _
    $region11: #{actor_forward.1} parent=1 // pred_check_branch
      %15 = sbr.rel (0) target = $region13
    $region12: #{actor_forward.1} parent=1 // pred_region
      %17 = vsyncadd [#allocation3], 0
      %s18 = sshll.u32 %s2, 4
      %s19 = int_to_ptr.hbm [resolvable:$true] %s18
      %s20 = sshll.u32 [#allocation2], 4
      %s21 = int_to_ptr.vmem [resolvable:$true] %s20
      %26 = dma.hbm_to_vmem [thread:$0]  %s19, 4096, %s21, [#allocation3], 256, 256, 16
    $region13: #{actor_forward.1} parent=1 // pred_fallthru
      _
    // Predicated region
    $region14: #{actor_forward.1} parent=1 // pred_check
      _
    $region15: #{actor_forward.1} parent=1 // pred_check_branch
      %28 = sbr.rel (0) target = $region17
    $region16: #{actor_forward.1} parent=1 // pred_region
      _
    $region17: #{actor_forward.1} parent=1 // pred_fallthru
      _
    // Predicated region
    $region18: #{actor_forward.1} parent=1 // pred_check
      _
    $region19: #{actor_forward.1} parent=1 // pred_check_branch
      %30 = sbr.rel (0) target = $region21
    $region20: #{actor_forward.1} parent=1 // pred_region
      %32 = dma.done [#allocation3], 4096
    $region21: #{actor_forward.1} parent=1 // pred_fallthru
      _
    %v34 = vld [vmem:[%s0] sm:$0xf]
    %v35 = vld [vmem:[%s1] sm:$0xf]
    %v36 = vld [vmem:[%s3] sm:$0x1]
    %v38 = vperm.slane %v36, 0
    %vm40 = vcmask 64512
    %v42 = vsel %vm40, %v34, 0
    %vm44 = vcmask 1043456
    %v46 = vsel %vm44, %v35, 0
    %48 = vmatpush.bf16.msra.mxu0 0
    %49 = vmatpush.bf16.msra.mxu0 0
    %50 = vmatpush.bf16.msra.mxu0 0
    %51 = vmatpush.bf16.msra.mxu0 0
    %52 = vmatpush.bf16.msra.mxu0 0
    %53 = vmatpush.bf16.msra.mxu0 0
    %54 = vmatpush.bf16.msra.mxu0 0
    %55 = vmatpush.bf16.msra.mxu0 %v46
    %56 = vmatmul.bf16.gmra.mxu0 %v42
    %v57 = vpop.f32.mrf.mxu0
    %v58 = vadd.f32 %v38, %v57
    %v59 = vpop.f32.mrf.mxu0
    %60 = vdwg.mxu0
    %v61 = vmax.f32 %v58, 0.0
    %v62 = vpack.c.bf16 %v61, %v61
    %v63 = vld [vmem:[#allocation2] sm:$0xf]
    %v64 = vld [vmem:[#allocation2 + $0x10] sm:$0xf]
    %v65 = vld [vmem:[#allocation2 + $0x20] sm:$0xf]
    %v66 = vld [vmem:[#allocation2 + $0x30] sm:$0xf]
    %v67 = vld [vmem:[#allocation2 + $0x40] sm:$0xf]
    %v68 = vld [vmem:[#allocation2 + $0x50] sm:$0xf]
    %v69 = vld [vmem:[#allocation2 + $0x60] sm:$0xf]
    %v70 = vld [vmem:[#allocation2 + $0x70] sm:$0xf]
    %v71 = vld [vmem:[#allocation2 + $0x80] sm:$0xf]
    %v72 = vld [vmem:[#allocation2 + $0x90] sm:$0xf]
    %v73 = vld [vmem:[#allocation2 + $0xa0] sm:$0xf]
    %v74 = vld [vmem:[#allocation2 + $0xb0] sm:$0xf]
    %v75 = vld [vmem:[#allocation2 + $0xc0] sm:$0xf]
    %v76 = vld [vmem:[#allocation2 + $0xd0] sm:$0xf]
    %v77 = vld [vmem:[#allocation2 + $0xe0] sm:$0xf]
    %v78 = vld [vmem:[#allocation2 + $0xf0] sm:$0xf]
    %v79 = vld [vmem:[%s3 + $0x1] sm:$0x1]
    %v81 = vperm.slane %v79, 0
    %v99 = vunpack.c.l.b16 %v63
    %v100 = vunpack.c.l.b16 %v64
    %v101 = vunpack.c.l.b16 %v65
    %v102 = vunpack.c.l.b16 %v66
    %v103 = vunpack.c.l.b16 %v67
    %v104 = vunpack.c.l.b16 %v68
    %v105 = vunpack.c.l.b16 %v69
    %v106 = vunpack.c.l.b16 %v70
    %v107 = vunpack.c.l.b16 %v71
    %v108 = vunpack.c.l.b16 %v72
    %v109 = vunpack.c.l.b16 %v73
    %v110 = vunpack.c.l.b16 %v74
    %v111 = vunpack.c.l.b16 %v75
    %v112 = vunpack.c.l.b16 %v76
    %v113 = vunpack.c.l.b16 %v77
    %v114 = vunpack.c.l.b16 %v78
    %v115 = vpack.c.b16 %v100, %v99
    %v116 = vpack.c.b16 %v102, %v101
    %v117 = vpack.c.b16 %v104, %v103
    %v118 = vpack.c.b16 %v106, %v105
    %v119 = vpack.c.b16 %v108, %v107
    %v120 = vpack.c.b16 %v110, %v109
    %v121 = vpack.c.b16 %v112, %v111
    %v122 = vpack.c.b16 %v114, %v113
    %131 = vmatpush.bf16.msra.mxu0 %v122
    %132 = vmatpush.bf16.msra.mxu0 %v121
    %133 = vmatpush.bf16.msra.mxu0 %v120
    %134 = vmatpush.bf16.msra.mxu0 %v119
    %135 = vmatpush.bf16.msra.mxu0 %v118
    %136 = vmatpush.bf16.msra.mxu0 %v117
    %137 = vmatpush.bf16.msra.mxu0 %v116
    %138 = vmatpush.bf16.msra.mxu0 %v115
    %139 = vmatmul.bf16.gmra.mxu0 %v62
    %v140 = vpop.f32.mrf.mxu0
    %v141 = vadd.f32 %v81, %v140
    %v142 = vpop.f32.mrf.mxu0
    %143 = vdwg.mxu0
    %v144 = vmax.f32 %v141, 0.0
    %v145 = vpack.c.bf16 %v144, %v144
    %v146 = vld [vmem:[#allocation2 + $0x4] sm:$0xf]
    %v147 = vld [vmem:[#allocation2 + $0x14] sm:$0xf]
    %v148 = vld [vmem:[#allocation2 + $0x24] sm:$0xf]
    %v149 = vld [vmem:[#allocation2 + $0x34] sm:$0xf]
    %v150 = vld [vmem:[#allocation2 + $0x44] sm:$0xf]
    %v151 = vld [vmem:[#allocation2 + $0x54] sm:$0xf]
    %v152 = vld [vmem:[#allocation2 + $0x64] sm:$0xf]
    %v153 = vld [vmem:[#allocation2 + $0x74] sm:$0xf]
    %v154 = vld [vmem:[#allocation2 + $0x84] sm:$0xf]
    %v155 = vld [vmem:[#allocation2 + $0x94] sm:$0xf]
    %v156 = vld [vmem:[#allocation2 + $0xa4] sm:$0xf]
    %v157 = vld [vmem:[#allocation2 + $0xb4] sm:$0xf]
    %v158 = vld [vmem:[#allocation2 + $0xc4] sm:$0xf]
    %v159 = vld [vmem:[#allocation2 + $0xd4] sm:$0xf]
    %v160 = vld [vmem:[#allocation2 + $0xe4] sm:$0xf]
    %v161 = vld [vmem:[#allocation2 + $0xf4] sm:$0xf]
    %v162 = vld [vmem:[%s3 + $0x2] sm:$0x1]
    %v164 = vperm.slane %v162, 0
    %v182 = vunpack.c.l.b16 %v146
    %v183 = vunpack.c.l.b16 %v147
    %v184 = vunpack.c.l.b16 %v148
    %v185 = vunpack.c.l.b16 %v149
    %v186 = vunpack.c.l.b16 %v150
    %v187 = vunpack.c.l.b16 %v151
    %v188 = vunpack.c.l.b16 %v152
    %v189 = vunpack.c.l.b16 %v153
    %v190 = vunpack.c.l.b16 %v154
    %v191 = vunpack.c.l.b16 %v155
    %v192 = vunpack.c.l.b16 %v156
    %v193 = vunpack.c.l.b16 %v157
    %v194 = vunpack.c.l.b16 %v158
    %v195 = vunpack.c.l.b16 %v159
    %v196 = vunpack.c.l.b16 %v160
    %v197 = vunpack.c.l.b16 %v161
    %v198 = vpack.c.b16 %v183, %v182
    %v199 = vpack.c.b16 %v185, %v184
    %v200 = vpack.c.b16 %v187, %v186
    %v201 = vpack.c.b16 %v189, %v188
    %v202 = vpack.c.b16 %v191, %v190
    %v203 = vpack.c.b16 %v193, %v192
    %v204 = vpack.c.b16 %v195, %v194
    %v205 = vpack.c.b16 %v197, %v196
    %214 = vmatpush.bf16.msra.mxu0 %v205
    %215 = vmatpush.bf16.msra.mxu0 %v204
    %216 = vmatpush.bf16.msra.mxu0 %v203
    %217 = vmatpush.bf16.msra.mxu0 %v202
    %218 = vmatpush.bf16.msra.mxu0 %v201
    %219 = vmatpush.bf16.msra.mxu0 %v200
    %220 = vmatpush.bf16.msra.mxu0 %v199
    %221 = vmatpush.bf16.msra.mxu0 %v198
    %222 = vmatmul.bf16.gmra.mxu0 %v145
    %v223 = vpop.f32.mrf.mxu0
    %v224 = vadd.f32 %v164, %v223
    %v225 = vpop.f32.mrf.mxu0
    %226 = vdwg.mxu0
    %v227 = vmax.f32 %v224, 0.0
    %v228 = vpack.c.bf16 %v227, %v227
    %v229 = vld [vmem:[#allocation2 + $0x8] sm:$0xf]
    %v230 = vld [vmem:[#allocation2 + $0x18] sm:$0xf]
    %v231 = vld [vmem:[#allocation2 + $0x28] sm:$0xf]
    %v232 = vld [vmem:[#allocation2 + $0x38] sm:$0xf]
    %v233 = vld [vmem:[#allocation2 + $0x48] sm:$0xf]
    %v234 = vld [vmem:[#allocation2 + $0x58] sm:$0xf]
    %v235 = vld [vmem:[#allocation2 + $0x68] sm:$0xf]
    %v236 = vld [vmem:[#allocation2 + $0x78] sm:$0xf]
    %v237 = vld [vmem:[#allocation2 + $0x88] sm:$0xf]
    %v238 = vld [vmem:[#allocation2 + $0x98] sm:$0xf]
    %v239 = vld [vmem:[#allocation2 + $0xa8] sm:$0xf]
    %v240 = vld [vmem:[#allocation2 + $0xb8] sm:$0xf]
    %v241 = vld [vmem:[#allocation2 + $0xc8] sm:$0xf]
    %v242 = vld [vmem:[#allocation2 + $0xd8] sm:$0xf]
    %v243 = vld [vmem:[#allocation2 + $0xe8] sm:$0xf]
    %v244 = vld [vmem:[#allocation2 + $0xf8] sm:$0xf]
    %v245 = vld [vmem:[%s3 + $0x3] sm:$0x1]
    %v247 = vperm.slane %v245, 0
    %v265 = vunpack.c.l.b16 %v229
    %v266 = vunpack.c.l.b16 %v230
    %v267 = vunpack.c.l.b16 %v231
    %v268 = vunpack.c.l.b16 %v232
    %v269 = vunpack.c.l.b16 %v233
    %v270 = vunpack.c.l.b16 %v234
    %v271 = vunpack.c.l.b16 %v235
    %v272 = vunpack.c.l.b16 %v236
    %v273 = vunpack.c.l.b16 %v237
    %v274 = vunpack.c.l.b16 %v238
    %v275 = vunpack.c.l.b16 %v239
    %v276 = vunpack.c.l.b16 %v240
    %v277 = vunpack.c.l.b16 %v241
    %v278 = vunpack.c.l.b16 %v242
    %v279 = vunpack.c.l.b16 %v243
    %v280 = vunpack.c.l.b16 %v244
    %v281 = vpack.c.b16 %v266, %v265
    %v282 = vpack.c.b16 %v268, %v267
    %v283 = vpack.c.b16 %v270, %v269
    %v284 = vpack.c.b16 %v272, %v271
    %v285 = vpack.c.b16 %v274, %v273
    %v286 = vpack.c.b16 %v276, %v275
    %v287 = vpack.c.b16 %v278, %v277
    %v288 = vpack.c.b16 %v280, %v279
    %297 = vmatpush.bf16.msra.mxu0 %v288
    %298 = vmatpush.bf16.msra.mxu0 %v287
    %299 = vmatpush.bf16.msra.mxu0 %v286
    %300 = vmatpush.bf16.msra.mxu0 %v285
    %301 = vmatpush.bf16.msra.mxu0 %v284
    %302 = vmatpush.bf16.msra.mxu0 %v283
    %303 = vmatpush.bf16.msra.mxu0 %v282
    %304 = vmatpush.bf16.msra.mxu0 %v281
    %305 = vmatmul.bf16.gmra.mxu0 %v228
    %v306 = vpop.f32.mrf.mxu0
    %v307 = vadd.f32 %v247, %v306
    %v308 = vpop.f32.mrf.mxu0
    %309 = vdwg.mxu0
    %v310 = vmax.f32 %v307, 0.0
    %v311 = vpack.c.bf16 %v310, %v310
    %v312 = vld [vmem:[#allocation2 + $0xc] sm:$0xf]
    %v313 = vld [vmem:[#allocation2 + $0x1c] sm:$0xf]
    %v314 = vld [vmem:[#allocation2 + $0x2c] sm:$0xf]
    %v315 = vld [vmem:[#allocation2 + $0x3c] sm:$0xf]
    %v316 = vld [vmem:[#allocation2 + $0x4c] sm:$0xf]
    %v317 = vld [vmem:[#allocation2 + $0x5c] sm:$0xf]
    %v318 = vld [vmem:[#allocation2 + $0x6c] sm:$0xf]
    %v319 = vld [vmem:[#allocation2 + $0x7c] sm:$0xf]
    %v320 = vld [vmem:[#allocation2 + $0x8c] sm:$0xf]
    %v321 = vld [vmem:[#allocation2 + $0x9c] sm:$0xf]
    %v322 = vld [vmem:[#allocation2 + $0xac] sm:$0xf]
    %v323 = vld [vmem:[#allocation2 + $0xbc] sm:$0xf]
    %v324 = vld [vmem:[#allocation2 + $0xcc] sm:$0xf]
    %v325 = vld [vmem:[#allocation2 + $0xdc] sm:$0xf]
    %v326 = vld [vmem:[#allocation2 + $0xec] sm:$0xf]
    %v327 = vld [vmem:[#allocation2 + $0xfc] sm:$0xf]
    %v328 = vld [vmem:[%s3 + $0x4] sm:$0x1]
    %v330 = vperm.slane %v328, 0
    %v348 = vunpack.c.l.b16 %v312
    %v349 = vunpack.c.l.b16 %v313
    %v350 = vunpack.c.l.b16 %v314
    %v351 = vunpack.c.l.b16 %v315
    %v352 = vunpack.c.l.b16 %v316
    %v353 = vunpack.c.l.b16 %v317
    %v354 = vunpack.c.l.b16 %v318
    %v355 = vunpack.c.l.b16 %v319
    %v356 = vunpack.c.l.b16 %v320
    %v357 = vunpack.c.l.b16 %v321
    %v358 = vunpack.c.l.b16 %v322
    %v359 = vunpack.c.l.b16 %v323
    %v360 = vunpack.c.l.b16 %v324
    %v361 = vunpack.c.l.b16 %v325
    %v362 = vunpack.c.l.b16 %v326
    %v363 = vunpack.c.l.b16 %v327
    %v364 = vpack.c.b16 %v349, %v348
    %v365 = vpack.c.b16 %v351, %v350
    %v366 = vpack.c.b16 %v353, %v352
    %v367 = vpack.c.b16 %v355, %v354
    %v368 = vpack.c.b16 %v357, %v356
    %v369 = vpack.c.b16 %v359, %v358
    %v370 = vpack.c.b16 %v361, %v360
    %v371 = vpack.c.b16 %v363, %v362
    %380 = vmatpush.bf16.msra.mxu0 %v371
    %381 = vmatpush.bf16.msra.mxu0 %v370
    %382 = vmatpush.bf16.msra.mxu0 %v369
    %383 = vmatpush.bf16.msra.mxu0 %v368
    %384 = vmatpush.bf16.msra.mxu0 %v367
    %385 = vmatpush.bf16.msra.mxu0 %v366
    %386 = vmatpush.bf16.msra.mxu0 %v365
    %387 = vmatpush.bf16.msra.mxu0 %v364
    %388 = vmatmul.bf16.gmra.mxu0 %v311
    %v389 = vpop.f32.mrf.mxu0
    %v390 = vadd.f32 %v330, %v389
    %v391 = vpop.f32.mrf.mxu0
    %392 = vdwg.mxu0
    %v393 = vtanh.pop %v390
    %394 = vst.msk [vmem:[%s4] sm:$0xff] %vm40, %v393
    // Predicated region
    $region22: #{actor_forward.1} parent=1 // pred_check
      _
    $region23: #{actor_forward.1} parent=1 // pred_check_branch
      %396 = sbr.rel (0) target = $region25
    $region24: #{actor_forward.1} parent=1 // pred_region
      _
    $region25: #{actor_forward.1} parent=1 // pred_fallthru
      _
    // Predicated region
    $region26: #{actor_forward.1} parent=1 // pred_check
      _
    $region27: #{actor_forward.1} parent=1 // pred_check_branch
      %398 = sbr.rel (0) target = $region29
    $region28: #{actor_forward.1} parent=1 // pred_region
      _
    $region29: #{actor_forward.1} parent=1 // pred_fallthru
      _
    %399 = vsyncpa [#allocation3], 1

</llo_original>
